<compile_context>
chip_gen: v5e
topology: v5e:2x2
jax: 0.10.0
libtpu: 0.0.40
codegen_flags: <defaults>
</compile_context>

<pallas_src>
import jax
import jax.numpy as jnp
from jax.experimental import pallas as pl
from jax.experimental.pallas import tpu as pltpu

BN_EPS = 1e-5
_MAX_TILE_B = 16384   # bf16 x block = 128 * 16384 * 2B = 4 MiB; double-buffered 8 MiB
_MIN_SPLIT_B = 1024   # below this a single grid step beats splitting across v7x's 2 TCs


def _round_up(v, m):
    return ((v + m - 1) // m) * m


def _choose_tile_b(B, tile_b):
    if tile_b is None:
        tile_b = _MAX_TILE_B
    if B >= _MIN_SPLIT_B:
        # Keep >=2 grid steps so dimension_semantics=("parallel",) can use both v7x TensorCores.
        tile_b = min(tile_b, _round_up(pl.cdiv(B, 2), 128))
    tile_b = _round_up(max(tile_b, 1), 128)   # lane-dim blocks must be multiples of 128 ...
    if tile_b >= B:
        return B                              # ... or span the full (untiled) batch dim
    return tile_b


def flatten_head_kernel(x_ref, ws_ref, t_ref, w2_ref, out_ref):
    # x_ref:  [K, TILE_B]  bf16, lane-dense transposed last-day slab (K = num_feature * nf)
    # ws_ref: [FP, K]      bf16 block-diagonal per-feature weights (BN scale folded in),
    #                      zero-padded to FP = round_up(num_feature + 1, 8) rows
    # t_ref:  [FP, 1]      f32 folded bias + BN shift (sentinel row = 1.0)
    # w2_ref: [FP, 1]      f32 outlinear weights (sentinel row = outlinear bias b2)
    # out_ref:[1, TILE_B]  f32
    z = jnp.dot(ws_ref[...], x_ref[...],
                preferred_element_type=jnp.float32)            # [FP, TILE_B] single bf16 MXU pass
    y = jnp.maximum(z + t_ref[...], 0.0) * w2_ref[...]         # sublane-broadcast bias/ReLU/scale
    out_ref[...] = jnp.sum(y, axis=0, keepdims=True).astype(out_ref.dtype)  # 8-sublane reduce


def _fold_params(params, num_feature, nf):
    """Fold per-feature Linear(nf,1) stack + eval BatchNorm1d + outlinear bias into 3 tensors."""
    f32 = jnp.float32
    gamma = params["bn_gamma"].astype(f32)
    beta = params["bn_beta"].astype(f32)
    mean = params["bn_mean"].astype(f32)
    var = params["bn_var"].astype(f32)
    w1 = params["w1"].astype(f32)                               # [F, D]
    b1 = params["b1"].astype(f32)                               # [F]
    w2 = params["w2"].astype(f32)                               # [F]
    b2 = params["b2"].astype(f32)                               # [1]

    s = gamma * jax.lax.rsqrt(var + BN_EPS)                     # [F] BN scale
    t = b1 * s + beta - mean * s                                # [F] folded bias + BN shift
    w1s = w1 * s[:, None]                                       # [F, D] BN scale folded into weights

    K = num_feature * nf
    fp = _round_up(num_feature + 1, 8)                          # sublane-aligned rows (+1 sentinel)

    # Block-diagonal [FP, K]: ws[f, f*nf + d] = w1[f, d] * s[f]; padded rows are zero.
    eye = jnp.eye(num_feature, dtype=f32)
    ws = (eye[:, :, None] * w1s[None, :, :]).reshape(num_feature, K)
    ws = jnp.pad(ws, ((0, fp - num_feature), (0, 0)))

    # Sentinel row `num_feature`: ws row = 0 -> z = 0, t = 1 -> relu -> 1, and its w2 slot
    # carries the outlinear bias, so the sublane reduction adds b2 with no extra scalar op.
    t_col = jnp.zeros((fp, 1), f32).at[:num_feature, 0].set(t).at[num_feature, 0].set(1.0)
    w2_col = jnp.zeros((fp, 1), f32).at[:num_feature, 0].set(w2).at[num_feature, 0].set(b2[0])

    return ws.astype(jnp.bfloat16), t_col, w2_col


def flatten_head_forward(x, params, last_day=True, tile_b=None):
    """x: [B, F, P, D]. Returns [B, 1] float32."""
    if not last_day:
        # TODO(synk): last_day=False (Flatten(-2) + Linear(nf,1)) is shape-inconsistent in the
        # reference module unless num_patches == 1; not implemented.
        raise NotImplementedError("only last_day=True is implemented")

    B, F, P, D = x.shape
    K = F * D

    # One fused XLA op: gather the last patch, flatten, cast to bf16 and transpose to a
    # lane-dense [K, B] slab (bf16 halves the slab's HBM traffic vs. the previous f32 slab).
    # TODO(synk): fully fusing this gather into the kernel would need a manually DMA'd
    # [tile_b, F, D] scratch that is (8,128)-padded ~8x, inflating in-kernel VPU work past the
    # DMA time for (F, D) = (4, 32); the single fused wrapper copy is the practical optimum here.
    x_t = x[:, :, P - 1, :].astype(jnp.bfloat16).reshape(B, K).T     # [K, B]

    ws, t_col, w2_col = _fold_params(params, F, D)
    fp = ws.shape[0]

    tile_b = _choose_tile_b(B, tile_b)
    grid = (pl.cdiv(B, tile_b),)

    out = pl.pallas_call(
        flatten_head_kernel,
        out_shape=jax.ShapeDtypeStruct((1, B), jnp.float32),
        grid_spec=pltpu.PrefetchScalarGridSpec(
            num_scalar_prefetch=0,
            grid=grid,
            in_specs=[
                pl.BlockSpec((K, tile_b), lambda i: (0, i)),   # lane-dense activation slab
                pl.BlockSpec((fp, K), lambda i: (0, 0)),       # folded block-diag weights (bf16)
                pl.BlockSpec((fp, 1), lambda i: (0, 0)),       # folded bias / BN shift column
                pl.BlockSpec((fp, 1), lambda i: (0, 0)),       # outlinear weight column (+ b2)
            ],
            out_specs=pl.BlockSpec((1, tile_b), lambda i: (0, i)),
        ),
        compiler_params=pltpu.CompilerParams(
            dimension_semantics=("parallel",),
            vmem_limit_bytes=32 * 1024 * 1024),
    )(x_t, ws, t_col, w2_col)

    return out.reshape(B, 1)


def make_params(key, num_feature, nf):
    """Deterministic synthetic init matching the module's parameter shapes."""
    ks = jax.random.split(key, 6)
    bound1 = 1.0 / jnp.sqrt(nf)
    bound2 = 1.0 / jnp.sqrt(num_feature)
    return {
        # linears[i] = Linear(nf, 1): weight [1, nf], bias [1] -> stacked over features
        "w1": jax.random.uniform(ks[0], (num_feature, nf), jnp.float32, -bound1, bound1),
        "b1": jax.random.uniform(ks[1], (num_feature,), jnp.float32, -bound1, bound1),
        # batch1 = BatchNorm1d(num_feature), eval-mode running stats
        "bn_gamma": jnp.ones((num_feature,), jnp.float32),
        "bn_beta": jnp.zeros((num_feature,), jnp.float32),
        "bn_mean": jax.random.normal(ks[2], (num_feature,), jnp.float32) * 0.1,
        "bn_var": jnp.abs(jax.random.normal(ks[3], (num_feature,), jnp.float32)) + 0.5,
        # outlinear[1] = Linear(num_feature, 1)
        "w2": jax.random.uniform(ks[4], (num_feature,), jnp.float32, -bound2, bound2),
        "b2": jax.random.uniform(ks[5], (1,), jnp.float32, -bound2, bound2),
    }


def reference_forward(x, params):
    """Pure-JAX float32 reference of the same forward pass (eval mode)."""
    x_last = x[:, :, -1, :].astype(jnp.float32)                 # [B, F, D]
    z = jnp.einsum("bfd,fd->bf", x_last, params["w1"],
                   precision=jax.lax.Precision.HIGHEST) + params["b1"]
    y = (z - params["bn_mean"]) * jax.lax.rsqrt(params["bn_var"] + BN_EPS)
    y = y * params["bn_gamma"] + params["bn_beta"]
    y = jnp.maximum(y, 0.0)
    return jnp.sum(y * params["w2"], axis=-1, keepdims=True) + params["b2"].reshape(1, 1)


if __name__ == "__main__":
    key = jax.random.PRNGKey(0)
    k_x, k_p, k_x2, k_x3 = jax.random.split(key, 4)

    # Small canonical test: batch=2, num_feature=4, patches=8, nf=32.
    B, F, P, D = 2, 4, 8, 32
    x = jax.random.normal(k_x, (B, F, P, D), jnp.float32)
    params = make_params(k_p, num_feature=F, nf=D)

    out = jax.block_until_ready(flatten_head_forward(x, params, last_day=True))
    ref = reference_forward(x, params)
    assert out.shape == (B, 1)
    # The kernel matmul is a single bf16 MXU pass (same numerics as XLA's default f32-matmul
    # policy on TPU), so compare against the f32 reference at a bf16-level tolerance.
    assert jnp.allclose(out, ref, atol=1e-2, rtol=1e-2), (out, ref)

    # Multi-tile grid with a partial last block (tile_b=256 -> grid=(3,), B=640).
    B2 = 640
    x2 = jax.random.normal(k_x2, (B2, F, P, D), jnp.float32)
    out2 = jax.block_until_ready(flatten_head_forward(x2, params, tile_b=256))
    ref2 = reference_forward(x2, params)
    assert out2.shape == (B2, 1)
    assert jnp.allclose(out2, ref2, atol=1e-2, rtol=1e-2)

    # Default tiling path: B >= _MIN_SPLIT_B -> >=2 grid steps (v7x megacore sharding).
    B3 = 2048
    x3 = jax.random.normal(k_x3, (B3, F, P, D), jnp.float32)
    out3 = jax.block_until_ready(flatten_head_forward(x3, params))
    ref3 = reference_forward(x3, params)
    assert out3.shape == (B3, 1)
    assert jnp.allclose(out3, ref3, atol=1e-2, rtol=1e-2)

    print("KERNEL_OK")
</pallas_src>

<mosaic_0001>
module attributes {stable_mosaic.version = 11 : i64} {
  func.func @flatten_head_kernel(%arg0: i32, %arg1: memref<128x2xbf16, #tpu.memory_space<vmem>>, %arg2: memref<8x128xbf16, #tpu.memory_space<vmem>>, %arg3: memref<8x1xf32, #tpu.memory_space<vmem>>, %arg4: memref<8x1xf32, #tpu.memory_space<vmem>>, %arg5: memref<1x2xf32, #tpu.memory_space<vmem>>) attributes {dimension_semantics = [#tpu.dimension_semantics<parallel>], iteration_bounds = array<i64: 1>, scalar_prefetch = 0 : i64, scratch_operands = 0 : i64, tpu.core_type = #tpu.core_type<tc>, window_params = [{transform_indices = @transform_0, window_bounds = array<i64: 128, 2>}, {pipeline_mode = #tpu.pipeline_mode<synchronous>, transform_indices = @transform_1, window_bounds = array<i64: 8, 128>}, {pipeline_mode = #tpu.pipeline_mode<synchronous>, transform_indices = @transform_2, window_bounds = array<i64: 8, 1>}, {pipeline_mode = #tpu.pipeline_mode<synchronous>, transform_indices = @transform_3, window_bounds = array<i64: 8, 1>}, {transform_indices = @transform_4, window_bounds = array<i64: 1, 2>}]} {
    %c0 = arith.constant 0 : index
    %c0_0 = arith.constant 0 : index
    %0 = vector.load %arg2[%c0, %c0_0] : memref<8x128xbf16, #tpu.memory_space<vmem>>, vector<8x128xbf16>
    %c0_1 = arith.constant 0 : index
    %c0_2 = arith.constant 0 : index
    %1 = vector.load %arg1[%c0_1, %c0_2] : memref<128x2xbf16, #tpu.memory_space<vmem>>, vector<128x2xbf16>
    %cst = arith.constant dense<0.000000e+00> : vector<8x2xf32>
    %2 = tpu.matmul %0, %1, %cst {dimension_numbers = #tpu.dot_dimension_numbers<[1], [0], [0], [1], [0, 0, 1, 1], [], []>} : vector<8x128xbf16>, vector<128x2xbf16>, vector<8x2xf32> -> vector<8x2xf32>
    %c0_3 = arith.constant 0 : index
    %c0_4 = arith.constant 0 : index
    %3 = vector.load %arg3[%c0_3, %c0_4] : memref<8x1xf32, #tpu.memory_space<vmem>>, vector<8x1xf32>
    %4 = vector.broadcast %3 : vector<8x1xf32> to vector<8x2xf32>
    %5 = arith.addf %2, %4 : vector<8x2xf32>
    %cst_5 = arith.constant 0.000000e+00 : f32
    %6 = vector.broadcast %cst_5 : f32 to vector<8x2xf32>
    %7 = arith.maximumf %5, %6 : vector<8x2xf32>
    %c0_6 = arith.constant 0 : index
    %c0_7 = arith.constant 0 : index
    %8 = vector.load %arg4[%c0_6, %c0_7] : memref<8x1xf32, #tpu.memory_space<vmem>>, vector<8x1xf32>
    %9 = vector.broadcast %8 : vector<8x1xf32> to vector<8x2xf32>
    %10 = arith.mulf %7, %9 : vector<8x2xf32>
    %cst_8 = arith.constant dense<0.000000e+00> : vector<2xf32>
    %11 = vector.multi_reduction <add>, %10, %cst_8 [0] : vector<8x2xf32> to vector<2xf32>
    %12 = vector.shape_cast %11 : vector<2xf32> to vector<1x2xf32>
    %c0_9 = arith.constant 0 : index
    %c0_10 = arith.constant 0 : index
    %13 = vector.load %arg5[%c0_9, %c0_10] : memref<1x2xf32, #tpu.memory_space<vmem>>, vector<1x2xf32>
    tpu.vector_store %arg5[%c0_9, %c0_10], %12 {strides = array<i32>} : memref<1x2xf32, #tpu.memory_space<vmem>>, vector<1x2xf32>,
    return
  }
  func.func @transform_0(%arg0: i32) -> (i32, i32) {
    %c0_i32 = arith.constant 0 : i32
    %c0_i32_0 = arith.constant 0 : i32
    return %c0_i32, %arg0 : i32, i32
  }
  func.func @transform_1(%arg0: i32) -> (i32, i32) {
    %c0_i32 = arith.constant 0 : i32
    %c0_i32_0 = arith.constant 0 : i32
    %c0_i32_1 = arith.constant 0 : i32
    return %c0_i32, %c0_i32_0 : i32, i32
  }
  func.func @transform_2(%arg0: i32) -> (i32, i32) {
    %c0_i32 = arith.constant 0 : i32
    %c0_i32_0 = arith.constant 0 : i32
    %c0_i32_1 = arith.constant 0 : i32
    return %c0_i32, %c0_i32_0 : i32, i32
  }
  func.func @transform_3(%arg0: i32) -> (i32, i32) {
    %c0_i32 = arith.constant 0 : i32
    %c0_i32_0 = arith.constant 0 : i32
    %c0_i32_1 = arith.constant 0 : i32
    return %c0_i32, %c0_i32_0 : i32, i32
  }
  func.func @transform_4(%arg0: i32) -> (i32, i32) {
    %c0_i32 = arith.constant 0 : i32
    %c0_i32_0 = arith.constant 0 : i32
    return %c0_i32, %arg0 : i32, i32
  }
}

</mosaic_0001>

<llo_original>
// kernel: tpu_custom_call.1
$region0: #{tpu_custom_call.1}
  #allocation0 [shape = 'u32[]', space=smem, size = 0x4, offset = 0x4, fixed_abs, tag = 'smem constant byte address 0x4 - core index']
  #allocation1 [shape = 'u32[72,128]{1,0:T(1,128)}', space=vmem, size = 0x9000, scoped, tag = 'internal scratch']
  %s0 = inlined_call_operand.vmem [shape: bf16[128,2], index: 0, kind: input, shape index: {}]
  %s1 = inlined_call_operand.vmem [shape: bf16[8,128], index: 1, kind: input, shape index: {}]
  %s2 = inlined_call_operand.vmem [shape: f32[8,1], index: 2, kind: input, shape index: {}]
  %s3 = inlined_call_operand.vmem [shape: f32[8,1], index: 3, kind: input, shape index: {}]
  %s4 = inlined_call_operand.hbm [shape: f32[1,2], index: 4, kind: output, shape index: {}]
  %s5 = sld [smem:[#allocation0]]
  $region26: #{tpu_custom_call.1} parent=0
    _
  %s7 = ssub.s32 1, %s5
  %s8 = scalar_select 0, %s7, %s5
  $region1: #{tpu_custom_call.1} parent=0
    #allocation2 [shape = 'u8[512]{0}', space=vmem, size = 0x400, scoped, tag = 'output window, operand 0, single buffered']
    #allocation3 [shape = 's32[1]{0}', space=sflag, size = 0x4, scoped, tag = 'scoped memory for tpu_custom_call.1']
    %9 = vsyncpa [#allocation3], 0
    // Predicated region
    $region2: #{tpu_custom_call.1} parent=1 // pred_check
      _
    $region3: #{tpu_custom_call.1} parent=1 // pred_check_branch
      %11 = sbr.rel (0) target = $region5
    $region4: #{tpu_custom_call.1} parent=1 // pred_region
      _
    $region5: #{tpu_custom_call.1} parent=1 // pred_fallthru
      _
    // Predicated region
    $region6: #{tpu_custom_call.1} parent=1 // pred_check
      _
    $region7: #{tpu_custom_call.1} parent=1 // pred_check_branch
      %13 = sbr.rel (0) target = $region9
    $region8: #{tpu_custom_call.1} parent=1 // pred_region
      _
    $region9: #{tpu_custom_call.1} parent=1 // pred_fallthru
      _
    // Predicated region
    $region10: #{tpu_custom_call.1} parent=1 // pred_check
      _
    $region11: #{tpu_custom_call.1} parent=1 // pred_check_branch
      %15 = sbr.rel (0) target = $region13
    $region12: #{tpu_custom_call.1} parent=1 // pred_region
      _
    $region13: #{tpu_custom_call.1} parent=1 // pred_fallthru
      _
    // Predicated region
    $region14: #{tpu_custom_call.1} parent=1 // pred_check
      _
    $region15: #{tpu_custom_call.1} parent=1 // pred_check_branch
      %17 = sbr.rel (0) target = $region17
    $region16: #{tpu_custom_call.1} parent=1 // pred_region
      _
    $region17: #{tpu_custom_call.1} parent=1 // pred_fallthru
      _
    %v18 = vld [vmem:[%s1] sm:$0xf]
    %v19 = vld [vmem:[%s0] sm:$0xf]
    %v20 = vld [vmem:[%s0 + $0x4] sm:$0xf]
    %v21 = vld [vmem:[%s0 + $0x8] sm:$0xf]
    %v22 = vld [vmem:[%s0 + $0xc] sm:$0xf]
    %v23 = vld [vmem:[%s0 + $0x10] sm:$0xf]
    %v24 = vld [vmem:[%s0 + $0x14] sm:$0xf]
    %v25 = vld [vmem:[%s0 + $0x18] sm:$0xf]
    %v26 = vld [vmem:[%s0 + $0x1c] sm:$0xf]
    %v27 = vld [vmem:[%s0 + $0x20] sm:$0xf]
    %v28 = vld [vmem:[%s0 + $0x24] sm:$0xf]
    %v29 = vld [vmem:[%s0 + $0x28] sm:$0xf]
    %v30 = vld [vmem:[%s0 + $0x2c] sm:$0xf]
    %v31 = vld [vmem:[%s0 + $0x30] sm:$0xf]
    %v32 = vld [vmem:[%s0 + $0x34] sm:$0xf]
    %v33 = vld [vmem:[%s0 + $0x38] sm:$0xf]
    %v34 = vld [vmem:[%s0 + $0x3c] sm:$0xf]
    %v35 = vld [vmem:[%s2] sm:$0xff]
    %37 = vset.pattern.permute.xlu0 0
    %38 = vperm.xlu0 %37, %v35
    %v39 = vpop.permute.xlu0 %38
    %v57 = vunpack.c.l.b16 %v19
    %v58 = vunpack.c.l.b16 %v20
    %v59 = vunpack.c.l.b16 %v21
    %v60 = vunpack.c.l.b16 %v22
    %v61 = vunpack.c.l.b16 %v23
    %v62 = vunpack.c.l.b16 %v24
    %v63 = vunpack.c.l.b16 %v25
    %v64 = vunpack.c.l.b16 %v26
    %v65 = vunpack.c.l.b16 %v27
    %v66 = vunpack.c.l.b16 %v28
    %v67 = vunpack.c.l.b16 %v29
    %v68 = vunpack.c.l.b16 %v30
    %v69 = vunpack.c.l.b16 %v31
    %v70 = vunpack.c.l.b16 %v32
    %v71 = vunpack.c.l.b16 %v33
    %v72 = vunpack.c.l.b16 %v34
    %v73 = vpack.c.b16 %v58, %v57
    %v74 = vpack.c.b16 %v60, %v59
    %v75 = vpack.c.b16 %v62, %v61
    %v76 = vpack.c.b16 %v64, %v63
    %v77 = vpack.c.b16 %v66, %v65
    %v78 = vpack.c.b16 %v68, %v67
    %v79 = vpack.c.b16 %v70, %v69
    %v80 = vpack.c.b16 %v72, %v71
    %89 = vmatpush.bf16.msra.mxu0 %v80
    %90 = vmatpush.bf16.msra.mxu0 %v79
    %91 = vmatpush.bf16.msra.mxu0 %v78
    %92 = vmatpush.bf16.msra.mxu0 %v77
    %93 = vmatpush.bf16.msra.mxu0 %v76
    %94 = vmatpush.bf16.msra.mxu0 %v75
    %95 = vmatpush.bf16.msra.mxu0 %v74
    %96 = vmatpush.bf16.msra.mxu0 %v73
    %97 = vmatmul.bf16.gmra.mxu0 %v18
    %v98 = vpop.f32.mrf.mxu0
    %v99 = vadd.f32 %v39, %v98
    %v100 = vpop.f32.mrf.mxu0
    %101 = vdwg.mxu0
    %v102 = vmax.f32 %v99, 0.0
    %v103 = vld [vmem:[%s3] sm:$0xff]
    %105 = vset.pattern.permute.xlu0 0
    %106 = vperm.xlu0 %105, %v103
    %v107 = vpop.permute.xlu0 %106
    %v109 = vmul.f32 %v102, %v107
    %vm110 = vcmask 15360
    %v111 = vsel %vm110, %v109, 0.0
    %v112 = vrot.slane %v111, 4
    %v113 = vadd.f32 %v111, %v112
    %v114 = vrot.slane %v113, 2
    %v115 = vadd.f32 %v113, %v114
    %v116 = vrot.slane %v115, 1
    %v117 = vadd.f32 %v115, %v116
    %vm118 = vcmask 8192
    %119 = vst.msk [vmem:[#allocation2] sm:$0x1] %vm118, %v117
    // Predicated region
    $region18: #{tpu_custom_call.1} parent=1 // pred_check
      _
    $region19: #{tpu_custom_call.1} parent=1 // pred_check_branch
      %121 = sbr.rel (0) target = $region21
    $region20: #{tpu_custom_call.1} parent=1 // pred_region
      %123 = vsyncadd [#allocation3], 0
      %s125 = sshll.u32 [#allocation2], 4
      %s126 = int_to_ptr.vmem [resolvable:$true] %s125
      %s127 = sshll.u32 %s4, 4
      %s128 = int_to_ptr.hbm [resolvable:$true] %s127
      %130 = dma.vmem_to_hbm [thread:$0]  %s126, 16, %s128, [#allocation3]
    $region21: #{tpu_custom_call.1} parent=1 // pred_fallthru
      _
    // Predicated region
    $region22: #{tpu_custom_call.1} parent=1 // pred_check
      _
    $region23: #{tpu_custom_call.1} parent=1 // pred_check_branch
      %132 = sbr.rel (0) target = $region25
    $region24: #{tpu_custom_call.1} parent=1 // pred_region
      %134 = dma.done [#allocation3], 16
    $region25: #{tpu_custom_call.1} parent=1 // pred_fallthru
      _
    %135 = vsyncpa [#allocation3], 1

</llo_original>
